<compile_context>
chip_gen: v7x
topology: tpu7x:2x2x1
jax: 0.10.0
libtpu: 0.0.40
codegen_flags: <defaults>
</compile_context>

<pallas_src>
import functools

import jax
import jax.numpy as jnp
from jax.experimental import pallas as pl
from jax.experimental.pallas import tpu as pltpu


def _negout_kernel(seed_ref, x_ref, o_ref, *, threshold):
    """Flip the sign of each element independently with probability prob.

    threshold = round(prob * 2**32) as a uint32; an element is flipped iff its
    per-element hash value (uniform uint32) is < threshold.
    """
    tile_r, lane_w = x_ref.shape
    pid = pl.program_id(0)

    # Unique 32-bit id for every element of this tile (global, so every grid
    # step gets different random bits).
    row = jax.lax.broadcasted_iota(jnp.uint32, (tile_r, lane_w), 0)
    col = jax.lax.broadcasted_iota(jnp.uint32, (tile_r, lane_w), 1)
    base_row = pid.astype(jnp.uint32) * jnp.uint32(tile_r)
    idx = (base_row + row) * jnp.uint32(lane_w) + col

    # Counter-based RNG: golden-ratio scramble + seed, then murmur3 fmix32.
    h = idx * jnp.uint32(0x9E3779B9) + seed_ref[0].astype(jnp.uint32)
    h = h ^ (h >> jnp.uint32(16))
    h = h * jnp.uint32(0x85EBCA6B)
    h = h ^ (h >> jnp.uint32(13))
    h = h * jnp.uint32(0xC2B2AE35)
    h = h ^ (h >> jnp.uint32(16))

    flip = h < jnp.uint32(threshold)          # Bernoulli(prob)
    x = x_ref[...]
    o_ref[...] = jnp.where(flip, -x, x)       # native dtype, no mask array


@functools.partial(jax.jit, static_argnames=("prob", "training"))
def negout(x, seed, *, prob, training=True):
    """JAX/Pallas equivalent of NegOut.forward.

    x: float array of any shape (e.g. NCHW).
    prob: python float (static), probability of flipping the sign.
    seed: int32 scalar seeding the in-kernel counter-based RNG.
    """
    if not training:
        return x

    orig_shape = x.shape
    n = x.size
    itemsize = jnp.dtype(x.dtype).itemsize

    # Pick the widest lane dimension (multiple of 128) that divides n so no
    # pad/slice copies are needed in the common case.
    lane_w = None
    for cand in (1024, 512, 256, 128):
        if n % cand == 0:
            lane_w = cand
            break
    if lane_w is None:
        # Rare ragged case: pad the flat vector up to a multiple of 128.
        lane_w = 128
        padded = pl.cdiv(n, lane_w) * lane_w
        flat = jnp.pad(x.reshape(-1), (0, padded - n))
    else:
        padded = n
        flat = x.reshape(-1)

    rows = padded // lane_w
    x2d = flat.reshape(rows, lane_w)

    # ~2 MiB tiles: with input+output double-buffered that's <= ~8 MiB VMEM,
    # safe on v5e/v6e/v7x scoped-VMEM defaults.
    target_rows = max(8, (2 * 1024 * 1024) // (lane_w * itemsize))
    tile_r = min(rows, target_rows)
    if tile_r < rows:
        tile_r = max(8, (tile_r // 8) * 8)   # sublane alignment for non-full blocks
    grid = (pl.cdiv(rows, tile_r),)

    # prob is a fixed module hyperparameter, so baking the threshold in as a
    # compile-time constant only recompiles per distinct prob.
    threshold = min(max(int(round(float(prob) * (2 ** 32))), 0), 2 ** 32 - 1)

    seed_arr = jnp.asarray(seed, dtype=jnp.int32).reshape(1)

    out2d = pl.pallas_call(
        functools.partial(_negout_kernel, threshold=threshold),
        out_shape=jax.ShapeDtypeStruct((rows, lane_w), x.dtype),
        grid=grid,
        in_specs=[
            pl.BlockSpec(memory_space=pltpu.MemorySpace.SMEM),   # seed scalar
            pl.BlockSpec((tile_r, lane_w), lambda i: (i, 0)),    # x tile
        ],
        out_specs=pl.BlockSpec((tile_r, lane_w), lambda i: (i, 0)),
        compiler_params=pltpu.CompilerParams(
            dimension_semantics=("parallel",)),
    )(seed_arr, x2d)

    out = out2d.reshape(-1)
    if padded != n:
        out = out[:n]
    return out.reshape(orig_shape)


if __name__ == "__main__":
    key = jax.random.PRNGKey(0)
    # NCHW input, consistent with a conv-style feature map.
    x = jax.random.normal(key, (2, 4, 16, 16), dtype=jnp.float32)
    prob = 0.3

    y = negout(x, 1234, prob=prob, training=True)
    y = jax.block_until_ready(y)

    # Sanity: output must be elementwise +/- x, and a plausible fraction flipped.
    assert y.shape == x.shape
    assert bool(jnp.array_equal(jnp.abs(y), jnp.abs(x))), (
        "magnitudes changed; NegOut must only flip signs")
    flipped = (jnp.sign(y) != jnp.sign(x)) & (x != 0)
    flip_frac = float(jnp.mean(flipped.astype(jnp.float32)))
    assert 0.15 < flip_frac < 0.45, (
        f"flip fraction {flip_frac} implausible for p={prob}")

    # Eval mode is identity.
    y_eval = jax.block_until_ready(negout(x, 1234, prob=prob, training=False))
    assert bool(jnp.array_equal(y_eval, x))

    print("KERNEL_OK")
</pallas_src>

<mosaic_0001>
module attributes {stable_mosaic.version = 11 : i64} {
  func.func @_negout_kernel(%arg0: i32, %arg1: memref<1xi32, #tpu.memory_space<smem>>, %arg2: memref<2x1024xf32, #tpu.memory_space<vmem>>, %arg3: memref<2x1024xf32, #tpu.memory_space<vmem>>) attributes {dimension_semantics = [#tpu.dimension_semantics<parallel>], iteration_bounds = array<i64: 1>, scalar_prefetch = 0 : i64, scratch_operands = 0 : i64, tpu.core_type = #tpu.core_type<tc>, window_params = [{transform_indices = @transform_0, window_bounds = array<i64: 1>}, {transform_indices = @transform_1, window_bounds = array<i64: 2, 1024>}, {transform_indices = @transform_2, window_bounds = array<i64: 2, 1024>}]} {
    %0 = tpu.iota {dimensions = array<i32: 0>} : vector<2x1024xi32>
    %1 = tpu.iota {dimensions = array<i32: 1>} : vector<2x1024xi32>
    %c2_i32 = arith.constant 2 : i32
    %2 = arith.muli %arg0, %c2_i32 : i32
    %3 = vector.broadcast %2 : i32 to vector<2x1024xi32>
    %4 = arith.addi %3, %0 : vector<2x1024xi32>
    %c1024_i32 = arith.constant 1024 : i32
    %5 = vector.broadcast %c1024_i32 : i32 to vector<2x1024xi32>
    %6 = arith.muli %4, %5 : vector<2x1024xi32>
    %7 = arith.addi %6, %1 : vector<2x1024xi32>
    %c-1640531527_i32 = arith.constant -1640531527 : i32
    %8 = vector.broadcast %c-1640531527_i32 : i32 to vector<2x1024xi32>
    %9 = arith.muli %7, %8 : vector<2x1024xi32>
    %c0 = arith.constant 0 : index
    %10 = memref.load %arg1[%c0] : memref<1xi32, #tpu.memory_space<smem>>
    %11 = vector.broadcast %10 : i32 to vector<2x1024xi32>
    %12 = arith.addi %9, %11 : vector<2x1024xi32>
    %c16_i32 = arith.constant 16 : i32
    %13 = vector.broadcast %c16_i32 : i32 to vector<2x1024xi32>
    %14 = arith.shrui %12, %13 : vector<2x1024xi32>
    %15 = arith.xori %12, %14 : vector<2x1024xi32>
    %c-2048144789_i32 = arith.constant -2048144789 : i32
    %16 = vector.broadcast %c-2048144789_i32 : i32 to vector<2x1024xi32>
    %17 = arith.muli %15, %16 : vector<2x1024xi32>
    %c13_i32 = arith.constant 13 : i32
    %18 = vector.broadcast %c13_i32 : i32 to vector<2x1024xi32>
    %19 = arith.shrui %17, %18 : vector<2x1024xi32>
    %20 = arith.xori %17, %19 : vector<2x1024xi32>
    %c-1028477387_i32 = arith.constant -1028477387 : i32
    %21 = vector.broadcast %c-1028477387_i32 : i32 to vector<2x1024xi32>
    %22 = arith.muli %20, %21 : vector<2x1024xi32>
    %c16_i32_0 = arith.constant 16 : i32
    %23 = vector.broadcast %c16_i32_0 : i32 to vector<2x1024xi32>
    %24 = arith.shrui %22, %23 : vector<2x1024xi32>
    %25 = arith.xori %22, %24 : vector<2x1024xi32>
    %c1288490189_i32 = arith.constant 1288490189 : i32
    %26 = vector.broadcast %c1288490189_i32 : i32 to vector<2x1024xi32>
    %27 = arith.cmpi ult, %25, %26 : vector<2x1024xi32>
    %c0_1 = arith.constant 0 : index
    %c0_2 = arith.constant 0 : index
    %28 = vector.load %arg2[%c0_1, %c0_2] : memref<2x1024xf32, #tpu.memory_space<vmem>>, vector<2x1024xf32>
    %cst = arith.constant 0.000000e+00 : f32
    %29 = vector.broadcast %cst : f32 to vector<2x1024xf32>
    %30 = arith.subf %29, %28 : vector<2x1024xf32>
    %31 = arith.select %27, %30, %28 : vector<2x1024xi1>, vector<2x1024xf32>
    %c0_3 = arith.constant 0 : index
    %c0_4 = arith.constant 0 : index
    %32 = vector.load %arg3[%c0_3, %c0_4] : memref<2x1024xf32, #tpu.memory_space<vmem>>, vector<2x1024xf32>
    tpu.vector_store %arg3[%c0_3, %c0_4], %31 {strides = array<i32>} : memref<2x1024xf32, #tpu.memory_space<vmem>>, vector<2x1024xf32>,
    return
  }
  func.func @transform_0(%arg0: i32) -> i32 {
    %c0_i32 = arith.constant 0 : i32
    %c0_i32_0 = arith.constant 0 : i32
    return %c0_i32 : i32
  }
  func.func @transform_1(%arg0: i32) -> (i32, i32) {
    %c0_i32 = arith.constant 0 : i32
    %c0_i32_0 = arith.constant 0 : i32
    return %arg0, %c0_i32 : i32, i32
  }
  func.func @transform_2(%arg0: i32) -> (i32, i32) {
    %c0_i32 = arith.constant 0 : i32
    %c0_i32_0 = arith.constant 0 : i32
    return %arg0, %c0_i32 : i32, i32
  }
}

</mosaic_0001>

<llo_original>
// kernel: negout.1
$region0: #{negout.1}
  #allocation0 [shape = 'u32[]', space=smem, size = 0x4, offset = 0x4, fixed_abs, tag = 'smem constant byte address 0x4 - core index']
  #allocation1 [shape = 'u32[144,128]{1,0:T(1,128)}', space=vmem, size = 0x12000, scoped, tag = 'internal scratch']
  #allocation2 [shape = 's32[1]{0:T(128)S(6)}', space=smem, size = 0x200, scoped, tag = 'scoped memory for negout.1']
  %s0 = inlined_call_operand.<no memory space> [shape: s32[1], index: 0, kind: input, shape index: {}]
  %s1 = inlined_call_operand.vmem [shape: f32[2,1024], index: 1, kind: input, shape index: {}]
  %s2 = inlined_call_operand.vmem [shape: f32[2,1024], index: 2, kind: output, shape index: {}]
  %s3 = sld [smem:[#allocation0]]
  $region18: #{negout.1} parent=0
    _
  %s5 = ssub.s32 1, %s3
  %s6 = scalar_select 0, %s5, %s3
  %7 = sst [smem:[#allocation2]] %s0
  // Predicated region
  $region2: #{negout.1} parent=0 // pred_check
    _
  $region3: #{negout.1} parent=0 // pred_check_branch
    %9 = sbr.rel (0) target = $region5
  $region4: #{negout.1} parent=0 // pred_region
    _
  $region5: #{negout.1} parent=0 // pred_fallthru
    _
  // Predicated region
  $region6: #{negout.1} parent=0 // pred_check
    _
  $region7: #{negout.1} parent=0 // pred_check_branch
    %11 = sbr.rel (0) target = $region9
  $region8: #{negout.1} parent=0 // pred_region
    _
  $region9: #{negout.1} parent=0 // pred_fallthru
    _
  %v12 = vlaneseq
  %v13 = vshrl.u32 %v12, 7
  %v14 = vlaneseq
  %v15 = vand.u32 %v14, 127
  %v16 = vadd.s32 %v15, 128
  %v17 = vadd.s32 %v15, 256
  %v18 = vadd.s32 %v15, 384
  %v19 = vadd.s32 %v15, 512
  %v20 = vadd.s32 %v15, 640
  %v21 = vadd.s32 %v15, 768
  %v22 = vadd.s32 %v15, 896
  %s23 = smul.u32 0, 2
  %v24 = vstv %s23
  %v25 = vadd.s32 %v24, %v13
  %v26 = vmul.u32 %v25, 1024
  %v27 = vadd.s32 %v26, %v15
  %v28 = vadd.s32 %v26, %v16
  %v29 = vadd.s32 %v26, %v17
  %v30 = vadd.s32 %v26, %v18
  %v31 = vadd.s32 %v26, %v19
  %v32 = vadd.s32 %v26, %v20
  %v33 = vadd.s32 %v26, %v21
  %v34 = vadd.s32 %v26, %v22
  %v35 = vmul.u32 %v27, 2654435769
  %v36 = vmul.u32 %v28, 2654435769
  %v37 = vmul.u32 %v29, 2654435769
  %v38 = vmul.u32 %v30, 2654435769
  %v39 = vmul.u32 %v31, 2654435769
  %v40 = vmul.u32 %v32, 2654435769
  %v41 = vmul.u32 %v33, 2654435769
  %v42 = vmul.u32 %v34, 2654435769
  %s43 = sld [smem:[#allocation2]]
  %v44 = vstv %s43
  %v45 = vadd.s32 %v35, %v44
  %v46 = vadd.s32 %v36, %v44
  %v47 = vadd.s32 %v37, %v44
  %v48 = vadd.s32 %v38, %v44
  %v49 = vadd.s32 %v39, %v44
  %v50 = vadd.s32 %v40, %v44
  %v51 = vadd.s32 %v41, %v44
  %v52 = vadd.s32 %v42, %v44
  %v53 = vshrl.u32 %v45, 16
  %v54 = vshrl.u32 %v46, 16
  %v55 = vshrl.u32 %v47, 16
  %v56 = vshrl.u32 %v48, 16
  %v57 = vshrl.u32 %v49, 16
  %v58 = vshrl.u32 %v50, 16
  %v59 = vshrl.u32 %v51, 16
  %v60 = vshrl.u32 %v52, 16
  %v61 = vxor.u32 %v45, %v53
  %v62 = vxor.u32 %v46, %v54
  %v63 = vxor.u32 %v47, %v55
  %v64 = vxor.u32 %v48, %v56
  %v65 = vxor.u32 %v49, %v57
  %v66 = vxor.u32 %v50, %v58
  %v67 = vxor.u32 %v51, %v59
  %v68 = vxor.u32 %v52, %v60
  %v69 = vmul.u32 %v61, 2246822507
  %v70 = vmul.u32 %v62, 2246822507
  %v71 = vmul.u32 %v63, 2246822507
  %v72 = vmul.u32 %v64, 2246822507
  %v73 = vmul.u32 %v65, 2246822507
  %v74 = vmul.u32 %v66, 2246822507
  %v75 = vmul.u32 %v67, 2246822507
  %v76 = vmul.u32 %v68, 2246822507
  %v77 = vshrl.u32 %v69, 13
  %v78 = vshrl.u32 %v70, 13
  %v79 = vshrl.u32 %v71, 13
  %v80 = vshrl.u32 %v72, 13
  %v81 = vshrl.u32 %v73, 13
  %v82 = vshrl.u32 %v74, 13
  %v83 = vshrl.u32 %v75, 13
  %v84 = vshrl.u32 %v76, 13
  %v85 = vxor.u32 %v69, %v77
  %v86 = vxor.u32 %v70, %v78
  %v87 = vxor.u32 %v71, %v79
  %v88 = vxor.u32 %v72, %v80
  %v89 = vxor.u32 %v73, %v81
  %v90 = vxor.u32 %v74, %v82
  %v91 = vxor.u32 %v75, %v83
  %v92 = vxor.u32 %v76, %v84
  %v93 = vmul.u32 %v85, 3266489909
  %v94 = vmul.u32 %v86, 3266489909
  %v95 = vmul.u32 %v87, 3266489909
  %v96 = vmul.u32 %v88, 3266489909
  %v97 = vmul.u32 %v89, 3266489909
  %v98 = vmul.u32 %v90, 3266489909
  %v99 = vmul.u32 %v91, 3266489909
  %v100 = vmul.u32 %v92, 3266489909
  %v101 = vshrl.u32 %v93, 16
  %v102 = vshrl.u32 %v94, 16
  %v103 = vshrl.u32 %v95, 16
  %v104 = vshrl.u32 %v96, 16
  %v105 = vshrl.u32 %v97, 16
  %v106 = vshrl.u32 %v98, 16
  %v107 = vshrl.u32 %v99, 16
  %v108 = vshrl.u32 %v100, 16
  %v109 = vxor.u32 %v93, %v101
  %v110 = vxor.u32 %v94, %v102
  %v111 = vxor.u32 %v95, %v103
  %v112 = vxor.u32 %v96, %v104
  %v113 = vxor.u32 %v97, %v105
  %v114 = vxor.u32 %v98, %v106
  %v115 = vxor.u32 %v99, %v107
  %v116 = vxor.u32 %v100, %v108
  %vm117 = vcmp.lt.u32.totalorder %v109, 1288490189
  %vm118 = vcmp.lt.u32.totalorder %v110, 1288490189
  %vm119 = vcmp.lt.u32.totalorder %v111, 1288490189
  %vm120 = vcmp.lt.u32.totalorder %v112, 1288490189
  %vm121 = vcmp.lt.u32.totalorder %v113, 1288490189
  %vm122 = vcmp.lt.u32.totalorder %v114, 1288490189
  %vm123 = vcmp.lt.u32.totalorder %v115, 1288490189
  %vm124 = vcmp.lt.u32.totalorder %v116, 1288490189
  %v125 = vld [vmem:[%s1] sm:$0xff]
  %v126 = vld [vmem:[%s1 + $0x8] sm:$0xff]
  %v127 = vsub.f32 0.0, %v125
  %v128 = vsub.f32 0.0, %v126
  %v131 = vcombine.high %v127, %v127
  %v133 = vunpack.c.l.s4 1983009808
  %v134 = vunpack.c.0.s8 %v133
  %v135 = vlaneseq
  %v136 = vshrl.u32 %v135, 7
  %v137 = vsub.s32 %v134, %v136
  %v138 = vrot.slane %v127, %v137
  %v140 = vunpack.c.l.s4 1983009808
  %v141 = vunpack.c.0.s8 %v140
  %v142 = vlaneseq
  %v143 = vshrl.u32 %v142, 7
  %v144 = vsub.s32 %v141, %v143
  %v145 = vrot.slane %v131, %v144
  %v146 = vcombine.high %v138, %v138
  %v147 = vcombine.high %v145, %v145
  %v148 = vcombine.high %v128, %v128
  %v150 = vunpack.c.l.s4 1983009808
  %v151 = vunpack.c.0.s8 %v150
  %v152 = vlaneseq
  %v153 = vshrl.u32 %v152, 7
  %v154 = vsub.s32 %v151, %v153
  %v155 = vrot.slane %v128, %v154
  %v157 = vunpack.c.l.s4 1983009808
  %v158 = vunpack.c.0.s8 %v157
  %v159 = vlaneseq
  %v160 = vshrl.u32 %v159, 7
  %v161 = vsub.s32 %v158, %v160
  %v162 = vrot.slane %v148, %v161
  %v163 = vcombine.high %v155, %v155
  %v164 = vcombine.high %v162, %v162
  %v175 = vcombine.high %v125, %v125
  %v177 = vunpack.c.l.s4 1983009808
  %v178 = vunpack.c.0.s8 %v177
  %v179 = vlaneseq
  %v180 = vshrl.u32 %v179, 7
  %v181 = vsub.s32 %v178, %v180
  %v182 = vrot.slane %v125, %v181
  %v184 = vunpack.c.l.s4 1983009808
  %v185 = vunpack.c.0.s8 %v184
  %v186 = vlaneseq
  %v187 = vshrl.u32 %v186, 7
  %v188 = vsub.s32 %v185, %v187
  %v189 = vrot.slane %v175, %v188
  %v190 = vcombine.high %v182, %v182
  %v191 = vcombine.high %v189, %v189
  %v192 = vcombine.high %v126, %v126
  %v194 = vunpack.c.l.s4 1983009808
  %v195 = vunpack.c.0.s8 %v194
  %v196 = vlaneseq
  %v197 = vshrl.u32 %v196, 7
  %v198 = vsub.s32 %v195, %v197
  %v199 = vrot.slane %v126, %v198
  %v201 = vunpack.c.l.s4 1983009808
  %v202 = vunpack.c.0.s8 %v201
  %v203 = vlaneseq
  %v204 = vshrl.u32 %v203, 7
  %v205 = vsub.s32 %v202, %v204
  %v206 = vrot.slane %v192, %v205
  %v207 = vcombine.high %v199, %v199
  %v208 = vcombine.high %v206, %v206
  %v217 = vsel %vm117, %v138, %v182
  %v218 = vsel %vm118, %v146, %v190
  %v219 = vsel %vm119, %v145, %v189
  %v220 = vsel %vm120, %v147, %v191
  %v221 = vsel %vm121, %v155, %v199
  %v222 = vsel %vm122, %v163, %v207
  %v223 = vsel %vm123, %v162, %v206
  %v224 = vsel %vm124, %v164, %v208
  %v233 = vcombine.low %v217, %v218
  %v234 = vcombine.low %v219, %v220
  %v236 = vunpack.c.l.s4 1983009808
  %v237 = vunpack.c.0.s8 %v236
  %v238 = vlaneseq
  %v239 = vshrl.u32 %v238, 7
  %v240 = vsub.s32 %v237, %v239
  %v241 = vrot.slane %v233, %v240
  %v243 = vunpack.c.l.s4 1983009808
  %v244 = vunpack.c.0.s8 %v243
  %v245 = vlaneseq
  %v246 = vshrl.u32 %v245, 7
  %v247 = vsub.s32 %v244, %v246
  %v248 = vrot.slane %v234, %v247
  %v249 = vcombine.low %v241, %v248
  %v250 = vcombine.low %v221, %v222
  %v251 = vcombine.low %v223, %v224
  %v253 = vunpack.c.l.s4 1983009808
  %v254 = vunpack.c.0.s8 %v253
  %v255 = vlaneseq
  %v256 = vshrl.u32 %v255, 7
  %v257 = vsub.s32 %v254, %v256
  %v258 = vrot.slane %v250, %v257
  %v260 = vunpack.c.l.s4 1983009808
  %v261 = vunpack.c.0.s8 %v260
  %v262 = vlaneseq
  %v263 = vshrl.u32 %v262, 7
  %v264 = vsub.s32 %v261, %v263
  %v265 = vrot.slane %v251, %v264
  %v266 = vcombine.low %v258, %v265
  %269 = vst [vmem:[%s2] sm:$0xff] %v249
  %270 = vst [vmem:[%s2 + $0x8] sm:$0xff] %v266
  // Predicated region
  $region10: #{negout.1} parent=0 // pred_check
    _
  $region11: #{negout.1} parent=0 // pred_check_branch
    %272 = sbr.rel (0) target = $region13
  $region12: #{negout.1} parent=0 // pred_region
    _
  $region13: #{negout.1} parent=0 // pred_fallthru
    _
  // Predicated region
  $region14: #{negout.1} parent=0 // pred_check
    _
  $region15: #{negout.1} parent=0 // pred_check_branch
    %274 = sbr.rel (0) target = $region17
  $region16: #{negout.1} parent=0 // pred_region
    _
  $region17: #{negout.1} parent=0 // pred_fallthru
    _

</llo_original>
